<compile_context>
chip_gen: v6e
topology: v6e:2x2x1
jax: 0.10.0
libtpu: 0.0.40
codegen_flags: <defaults>
</compile_context>

<pallas_src>
import functools

import jax
import jax.numpy as jnp
from jax.experimental import pallas as pl
from jax.experimental.pallas import tpu as pltpu

EPS = 1e-5  # PyTorch InstanceNorm2d default eps


def adain_modulate_kernel(x_ref, g_ref, b_ref, o_ref):
    # x_ref block: (TR, HW) -- each row is one (sample, channel) instance.
    x = x_ref[...].astype(jnp.float32)

    # InstanceNorm2d (affine=False): per-row mean / biased var over H*W.
    mean = jnp.mean(x, axis=1, keepdims=True)                  # (TR, 1)
    centered = x - mean
    var = jnp.mean(centered * centered, axis=1, keepdims=True)  # (TR, 1)
    normalized = centered * jax.lax.rsqrt(var + EPS)            # (TR, HW)

    gamma = g_ref[...].astype(jnp.float32)                      # (TR, 1)
    beta = b_ref[...].astype(jnp.float32)                       # (TR, 1)

    o_ref[...] = (normalized * (1.0 + gamma) + beta).astype(o_ref.dtype)


@functools.partial(jax.jit, static_argnames=("row_tile",))
def adain_pallas(x, feature, w_sh, b_sh, w_g, b_g, w_b, b_b, *, row_tile=256):
    """ADAIN forward.

    x:       (N, C, H, W)   activations (NCHW, like PyTorch)
    feature: (N, F) or (N, F, 1, 1) etc. (flattened like feature.view(N, -1))
    w_sh:    (128, F)  b_sh: (128,)     -- mlp_shared Linear (PyTorch layout)
    w_g:     (C, 128)  b_g:  (C,)       -- mlp_gamma
    w_b:     (C, 128)  b_b:  (C,)       -- mlp_beta
    """
    N, C, H, W = x.shape
    HW = H * W
    R = N * C

    # --- MLP hoisted to XLA: three tiny matmuls for the whole batch. -------
    f = feature.reshape(N, -1).astype(jnp.float32)
    actv = jnp.maximum(f @ w_sh.astype(jnp.float32).T + b_sh, 0.0)   # (N, 128)
    gamma = (actv @ w_g.astype(jnp.float32).T + b_g).reshape(R, 1)   # (N*C, 1)
    beta = (actv @ w_b.astype(jnp.float32).T + b_b).reshape(R, 1)    # (N*C, 1)

    # --- Lane-dense, sublane-dense layout: rows = (sample, channel). -------
    x2 = x.reshape(R, HW)

    # Row-tile: multiple of 8, capped so 2 buffers x (in + out) x block stays
    # well under v7x's 64 MiB VMEM even for large HW.
    max_block_bytes = 8 * 1024 * 1024
    bytes_per_row = HW * jnp.dtype(x.dtype).itemsize
    rows_cap = max(8, (max_block_bytes // max(bytes_per_row, 1)) // 8 * 8)
    rows_needed = pl.cdiv(R, 8) * 8
    TR = int(min(row_tile, rows_cap, rows_needed))
    TR = max(8, (TR // 8) * 8)

    Rp = pl.cdiv(R, TR) * TR
    if Rp != R:
        pad = Rp - R
        x2 = jnp.pad(x2, ((0, pad), (0, 0)))
        gamma = jnp.pad(gamma, ((0, pad), (0, 0)))
        beta = jnp.pad(beta, ((0, pad), (0, 0)))

    grid = (Rp // TR,)
    out2 = pl.pallas_call(
        adain_modulate_kernel,
        out_shape=jax.ShapeDtypeStruct((Rp, HW), x.dtype),
        grid=grid,
        in_specs=[
            pl.BlockSpec((TR, HW), lambda r: (r, 0)),   # x rows
            pl.BlockSpec((TR, 1), lambda r: (r, 0)),    # gamma rows
            pl.BlockSpec((TR, 1), lambda r: (r, 0)),    # beta rows
        ],
        out_specs=pl.BlockSpec((TR, HW), lambda r: (r, 0)),
        compiler_params=pltpu.CompilerParams(
            dimension_semantics=("parallel",)),
    )(x2, gamma, beta)

    return out2[:R].reshape(N, C, H, W)


def adain_ref(x, feature, w_sh, b_sh, w_g, b_g, w_b, b_b):
    """Pure-JAX reference mirroring the PyTorch module, for validation."""
    N = x.shape[0]
    mean = jnp.mean(x, axis=(2, 3), keepdims=True)
    var = jnp.mean((x - mean) ** 2, axis=(2, 3), keepdims=True)
    normalized = (x - mean) * jax.lax.rsqrt(var + EPS)
    f = feature.reshape(N, -1)
    actv = jnp.maximum(f @ w_sh.T + b_sh, 0.0)
    gamma = actv @ w_g.T + b_g
    beta = actv @ w_b.T + b_b
    return normalized * (1.0 + gamma[:, :, None, None]) + beta[:, :, None, None]


if __name__ == "__main__":
    # Small deterministic shapes consistent with ADAIN(norm_nc=C, feature_nc=F).
    N, C, H, W = 2, 4, 16, 16
    F = 32
    NH = 128  # nhidden is fixed to 128 in the module

    key = jax.random.PRNGKey(0)
    ks = jax.random.split(key, 8)
    x = jax.random.normal(ks[0], (N, C, H, W), jnp.float32)
    feature = jax.random.normal(ks[1], (N, F), jnp.float32)
    # Linear weights stored PyTorch-style as (out_features, in_features).
    w_sh = jax.random.normal(ks[2], (NH, F), jnp.float32) * 0.1
    b_sh = jax.random.normal(ks[3], (NH,), jnp.float32) * 0.1
    w_g = jax.random.normal(ks[4], (C, NH), jnp.float32) * 0.1
    b_g = jax.random.normal(ks[5], (C,), jnp.float32) * 0.1
    w_b = jax.random.normal(ks[6], (C, NH), jnp.float32) * 0.1
    b_b = jax.random.normal(ks[7], (C,), jnp.float32) * 0.1

    out = adain_pallas(x, feature, w_sh, b_sh, w_g, b_g, w_b, b_b)
    out = jax.block_until_ready(out)

    ref = adain_ref(x, feature, w_sh, b_sh, w_g, b_g, w_b, b_b)
    assert out.shape == (N, C, H, W) and out.dtype == jnp.float32
    assert jnp.allclose(out, ref, atol=2e-3, rtol=2e-3), "mismatch vs reference"

    print("KERNEL_OK")
</pallas_src>

<mosaic_0001>
module attributes {stable_mosaic.version = 11 : i64} {
  func.func @adain_modulate_kernel(%arg0: i32, %arg1: memref<8x256xf32, #tpu.memory_space<vmem>>, %arg2: memref<8x1xf32, #tpu.memory_space<vmem>>, %arg3: memref<8x1xf32, #tpu.memory_space<vmem>>, %arg4: memref<8x256xf32, #tpu.memory_space<vmem>>) attributes {dimension_semantics = [#tpu.dimension_semantics<parallel>], iteration_bounds = array<i64: 1>, scalar_prefetch = 0 : i64, scratch_operands = 0 : i64, tpu.core_type = #tpu.core_type<tc>, window_params = [{transform_indices = @transform_0, window_bounds = array<i64: 8, 256>}, {transform_indices = @transform_1, window_bounds = array<i64: 8, 1>}, {transform_indices = @transform_2, window_bounds = array<i64: 8, 1>}, {transform_indices = @transform_3, window_bounds = array<i64: 8, 256>}]} {
    %c0 = arith.constant 0 : index
    %c0_0 = arith.constant 0 : index
    %0 = vector.load %arg1[%c0, %c0_0] : memref<8x256xf32, #tpu.memory_space<vmem>>, vector<8x256xf32>
    %cst = arith.constant dense<0.000000e+00> : vector<8xf32>
    %1 = vector.multi_reduction <add>, %0, %cst [1] : vector<8x256xf32> to vector<8xf32>
    %2 = vector.shape_cast %1 : vector<8xf32> to vector<8x1xf32>
    %cst_1 = arith.constant 2.560000e+02 : f32
    %3 = vector.broadcast %cst_1 : f32 to vector<8x1xf32>
    %4 = arith.divf %2, %3 : vector<8x1xf32>
    %5 = vector.broadcast %4 : vector<8x1xf32> to vector<8x256xf32>
    %6 = arith.subf %0, %5 : vector<8x256xf32>
    %7 = arith.mulf %6, %6 : vector<8x256xf32>
    %cst_2 = arith.constant dense<0.000000e+00> : vector<8xf32>
    %8 = vector.multi_reduction <add>, %7, %cst_2 [1] : vector<8x256xf32> to vector<8xf32>
    %9 = vector.shape_cast %8 : vector<8xf32> to vector<8x1xf32>
    %cst_3 = arith.constant 2.560000e+02 : f32
    %10 = vector.broadcast %cst_3 : f32 to vector<8x1xf32>
    %11 = arith.divf %9, %10 : vector<8x1xf32>
    %cst_4 = arith.constant 9.99999974E-6 : f32
    %12 = vector.broadcast %cst_4 : f32 to vector<8x1xf32>
    %13 = arith.addf %11, %12 : vector<8x1xf32>
    %14 = math.rsqrt %13 : vector<8x1xf32>
    %15 = vector.broadcast %14 : vector<8x1xf32> to vector<8x256xf32>
    %16 = arith.mulf %6, %15 : vector<8x256xf32>
    %c0_5 = arith.constant 0 : index
    %c0_6 = arith.constant 0 : index
    %17 = vector.load %arg2[%c0_5, %c0_6] : memref<8x1xf32, #tpu.memory_space<vmem>>, vector<8x1xf32>
    %c0_7 = arith.constant 0 : index
    %c0_8 = arith.constant 0 : index
    %18 = vector.load %arg3[%c0_7, %c0_8] : memref<8x1xf32, #tpu.memory_space<vmem>>, vector<8x1xf32>
    %cst_9 = arith.constant 1.000000e+00 : f32
    %19 = vector.broadcast %cst_9 : f32 to vector<8x1xf32>
    %20 = arith.addf %19, %17 : vector<8x1xf32>
    %21 = vector.broadcast %20 : vector<8x1xf32> to vector<8x256xf32>
    %22 = arith.mulf %16, %21 : vector<8x256xf32>
    %23 = vector.broadcast %18 : vector<8x1xf32> to vector<8x256xf32>
    %24 = arith.addf %22, %23 : vector<8x256xf32>
    %c0_10 = arith.constant 0 : index
    %c0_11 = arith.constant 0 : index
    %25 = vector.load %arg4[%c0_10, %c0_11] : memref<8x256xf32, #tpu.memory_space<vmem>>, vector<8x256xf32>
    tpu.vector_store %arg4[%c0_10, %c0_11], %24 {strides = array<i32>} : memref<8x256xf32, #tpu.memory_space<vmem>>, vector<8x256xf32>,
    return
  }
  func.func @transform_0(%arg0: i32) -> (i32, i32) {
    %c0_i32 = arith.constant 0 : i32
    %c0_i32_0 = arith.constant 0 : i32
    return %arg0, %c0_i32 : i32, i32
  }
  func.func @transform_1(%arg0: i32) -> (i32, i32) {
    %c0_i32 = arith.constant 0 : i32
    %c0_i32_0 = arith.constant 0 : i32
    return %arg0, %c0_i32 : i32, i32
  }
  func.func @transform_2(%arg0: i32) -> (i32, i32) {
    %c0_i32 = arith.constant 0 : i32
    %c0_i32_0 = arith.constant 0 : i32
    return %arg0, %c0_i32 : i32, i32
  }
  func.func @transform_3(%arg0: i32) -> (i32, i32) {
    %c0_i32 = arith.constant 0 : i32
    %c0_i32_0 = arith.constant 0 : i32
    return %arg0, %c0_i32 : i32, i32
  }
}

</mosaic_0001>

<llo_original>
// kernel: adain_pallas.1
$region0: #{adain_pallas.1}
  #allocation0 [shape = 'u32[]', space=smem, size = 0x4, offset = 0x4, fixed_abs, tag = 'smem constant byte address 0x4 - core index']
  #allocation1 [shape = 'u32[144,128]{1,0:T(1,128)}', space=vmem, size = 0x12000, scoped, tag = 'internal scratch']
  %s0 = inlined_call_operand.vmem [shape: f32[8,256], index: 0, kind: input, shape index: {}]
  %s1 = inlined_call_operand.vmem [shape: f32[8,1], index: 1, kind: input, shape index: {}]
  %s2 = inlined_call_operand.vmem [shape: f32[8,1], index: 2, kind: input, shape index: {}]
  %s3 = inlined_call_operand.vmem [shape: f32[8,256], index: 3, kind: output, shape index: {}]
  %s4 = sld [smem:[#allocation0]]
  $region22: #{adain_pallas.1} parent=0
    _
  %s6 = ssub.s32 1, %s4
  %s7 = scalar_select 0, %s6, %s4
  // Predicated region
  $region2: #{adain_pallas.1} parent=0 // pred_check
    _
  $region3: #{adain_pallas.1} parent=0 // pred_check_branch
    %9 = sbr.rel (0) target = $region5
  $region4: #{adain_pallas.1} parent=0 // pred_region
    _
  $region5: #{adain_pallas.1} parent=0 // pred_fallthru
    _
  // Predicated region
  $region6: #{adain_pallas.1} parent=0 // pred_check
    _
  $region7: #{adain_pallas.1} parent=0 // pred_check_branch
    %11 = sbr.rel (0) target = $region9
  $region8: #{adain_pallas.1} parent=0 // pred_region
    _
  $region9: #{adain_pallas.1} parent=0 // pred_fallthru
    _
  // Predicated region
  $region10: #{adain_pallas.1} parent=0 // pred_check
    _
  $region11: #{adain_pallas.1} parent=0 // pred_check_branch
    %13 = sbr.rel (0) target = $region13
  $region12: #{adain_pallas.1} parent=0 // pred_region
    _
  $region13: #{adain_pallas.1} parent=0 // pred_fallthru
    _
  %v14 = vld [vmem:[%s0] sm:$0xff]
  %v15 = vld [vmem:[%s0 + $0x8] sm:$0xff]
  %v16 = vadd.f32 %v14, %v15
  %17 = vadd.xlane.f32.xlu0 %v16
  %v18 = vpop.xlane.xlu0 %17
  %v19 = vrcp.pop 256.0
  %v20 = vmul.f32 %v18, %v19
  %v21 = vsub.f32 %v14, %v20
  %v22 = vsub.f32 %v15, %v20
  %v23 = vmul.f32 %v21, %v21
  %v24 = vmul.f32 %v22, %v22
  %v25 = vadd.f32 %v23, %v24
  %26 = vadd.xlane.f32.xlu0 %v25
  %v27 = vpop.xlane.xlu0 %26
  %v28 = vmul.f32 %v27, %v19
  %v29 = vadd.f32 %v28, 1e-05
  %v30 = vrsqrt.pop %v29
  %v31 = vmul.f32 %v21, %v30
  %v32 = vmul.f32 %v22, %v30
  %v33 = vld [vmem:[%s1] sm:$0xff]
  %v34 = vld [vmem:[%s2] sm:$0xff]
  %v35 = vadd.f32 %v33, 1.0
  %37 = vset.pattern.permute.xlu0 0
  %38 = vperm.xlu0 %37, %v35
  %v39 = vpop.permute.xlu0 %38
  %v41 = vmul.f32 %v31, %v39
  %v42 = vmul.f32 %v32, %v39
  %44 = vset.pattern.permute.xlu0 0
  %45 = vperm.xlu0 %44, %v34
  %v46 = vpop.permute.xlu0 %45
  %v48 = vadd.f32 %v41, %v46
  %v49 = vadd.f32 %v42, %v46
  %50 = vst [vmem:[%s3] sm:$0xff] %v48
  %51 = vst [vmem:[%s3 + $0x8] sm:$0xff] %v49
  // Predicated region
  $region14: #{adain_pallas.1} parent=0 // pred_check
    _
  $region15: #{adain_pallas.1} parent=0 // pred_check_branch
    %53 = sbr.rel (0) target = $region17
  $region16: #{adain_pallas.1} parent=0 // pred_region
    _
  $region17: #{adain_pallas.1} parent=0 // pred_fallthru
    _
  // Predicated region
  $region18: #{adain_pallas.1} parent=0 // pred_check
    _
  $region19: #{adain_pallas.1} parent=0 // pred_check_branch
    %55 = sbr.rel (0) target = $region21
  $region20: #{adain_pallas.1} parent=0 // pred_region
    _
  $region21: #{adain_pallas.1} parent=0 // pred_fallthru
    _

</llo_original>
